<compile_context>
chip_gen: v7x
topology: tpu7x:2x2x1
jax: 0.10.0
libtpu: 0.0.40
codegen_flags: <defaults>
</compile_context>

<pallas_src>
import functools

import jax
import jax.numpy as jnp
from jax.experimental import pallas as pl
from jax.experimental.pallas import tpu as pltpu


def bce_loss_kernel(pred_ref, targ_ref, out_ref, acc_ref, *, n_valid, num_classes):
    i = pl.program_id(0)

    @pl.when(i == 0)
    def _init():
        acc_ref[...] = jnp.zeros_like(acc_ref)

    x = pred_ref[...].astype(jnp.float32)      # [C, TILE_N] logits (classes on sublanes)
    t = targ_ref[...]                          # [1, TILE_N] int32 labels

    c, tn = x.shape
    cls = jax.lax.broadcasted_iota(jnp.int32, (c, tn), 0)            # class index per row
    pos = jax.lax.broadcasted_iota(jnp.int32, (c, tn), 1) + i * tn   # global batch index
    # Mask instead of slicing: drop class 0 and any batch-padding columns.
    valid = (cls >= 1) & (pos < n_valid)

    # One-hot target via broadcasted compare (labels vs class index).
    z = (t == cls).astype(jnp.float32)                               # [C, TILE_N]

    # Numerically-stable BCE-with-logits: max(x,0) - x*z + log1p(exp(-|x|))
    loss = jnp.maximum(x, 0.0) - x * z + jnp.log1p(jnp.exp(-jnp.abs(x)))

    # Vector accumulation (VPU only) -- defer the scalar reduce to the last step.
    acc_ref[...] += jnp.where(valid, loss, 0.0)

    @pl.when(i == pl.num_programs(0) - 1)
    def _finalize():
        out_ref[0, 0] = jnp.sum(acc_ref[...]) / jnp.float32(num_classes - 1)


def bce_loss(pred, targ, *, tile_n=4096):
    """pred: [N, C] float logits, targ: [N] int labels. Returns scalar f32 loss."""
    n, c = pred.shape

    # Lane-dense layout: batch on lanes, classes on sublanes. Stream native dtype
    # (no wrapper-side f32 copy); the kernel upcasts per-tile.
    pred_t = pred.T                                    # [C, N]
    targ2d = targ.astype(jnp.int32).reshape(1, n)      # [1, N]

    # Tile the batch axis; tiles must be a multiple of 128 lanes. Clamp for small N.
    tile_n = max(128, min(tile_n, pl.cdiv(n, 128) * 128))
    n_pad = pl.cdiv(n, tile_n) * tile_n
    if n_pad != n:
        pred_t = jnp.pad(pred_t, ((0, 0), (0, n_pad - n)))
        targ2d = jnp.pad(targ2d, ((0, 0), (0, n_pad - n)))

    grid = (n_pad // tile_n,)
    itemsize = jnp.dtype(pred.dtype).itemsize

    kernel = functools.partial(bce_loss_kernel, n_valid=n, num_classes=c)

    out = pl.pallas_call(
        kernel,
        out_shape=jax.ShapeDtypeStruct((1, 1), jnp.float32),
        grid=grid,
        in_specs=[
            pl.BlockSpec((c, tile_n), lambda i: (0, i)),   # logits tile  [C, TILE_N]
            pl.BlockSpec((1, tile_n), lambda i: (0, i)),   # labels tile  [1, TILE_N]
        ],
        out_specs=pl.BlockSpec(memory_space=pltpu.SMEM),   # scalar output, resident
        scratch_shapes=[pltpu.VMEM((c, tile_n), jnp.float32)],  # vector accumulator
        compiler_params=pltpu.CompilerParams(
            dimension_semantics=("arbitrary",),            # reduction over batch tiles
            vmem_limit_bytes=32 * 1024 * 1024,             # safe on v5e/v6e/v7x
        ),
        cost_estimate=pl.CostEstimate(
            flops=6 * n * c,
            transcendentals=2 * n * c,
            bytes_accessed=n * c * itemsize + n * 4 + 4,
        ),
    )(pred_t, targ2d)
    return out[0, 0]


def bce_loss_ref(pred, targ):
    """Pure-JAX reference mirroring the PyTorch module."""
    n, c = pred.shape
    target = jax.nn.one_hot(targ, c, dtype=jnp.float32)[:, 1:]
    x = pred[:, 1:].astype(jnp.float32)
    loss = jnp.maximum(x, 0.0) - x * target + jnp.log1p(jnp.exp(-jnp.abs(x)))
    return jnp.sum(loss) / (c - 1)


if __name__ == "__main__":
    key = jax.random.PRNGKey(0)

    # Test 1: small shape (batch=16, num_classes=4) -- single tile, padded batch.
    num_classes = 4
    batch = 16
    k_pred, k_targ, key = jax.random.split(key, 3)
    pred = jax.random.normal(k_pred, (batch, num_classes), dtype=jnp.float32)
    targ = jax.random.randint(k_targ, (batch,), 0, num_classes, dtype=jnp.int32)

    out = jax.block_until_ready(bce_loss(pred, targ))
    ref = bce_loss_ref(pred, targ)
    assert jnp.allclose(out, ref, rtol=1e-5, atol=1e-4), (out, ref)

    # Test 2: multi-tile accumulation path (N not a multiple of the tile).
    batch2 = 300
    k_pred2, k_targ2, key = jax.random.split(key, 3)
    pred2 = jax.random.normal(k_pred2, (batch2, num_classes), dtype=jnp.float32)
    targ2 = jax.random.randint(k_targ2, (batch2,), 0, num_classes, dtype=jnp.int32)

    out2 = jax.block_until_ready(bce_loss(pred2, targ2, tile_n=128))
    ref2 = bce_loss_ref(pred2, targ2)
    assert jnp.allclose(out2, ref2, rtol=1e-5, atol=1e-4), (out2, ref2)

    print("KERNEL_OK")
</pallas_src>

<mosaic_0001>
module attributes {stable_mosaic.version = 11 : i64} {
  func.func @bce_loss_kernel(%arg0: i32, %arg1: memref<4x128xf32, #tpu.memory_space<vmem>>, %arg2: memref<1x128xi32, #tpu.memory_space<vmem>>, %arg3: memref<1x1xf32, #tpu.memory_space<smem>>, %arg4: memref<4x128xf32, #tpu.memory_space<vmem>>) attributes {dimension_semantics = [#tpu.dimension_semantics<arbitrary>], iteration_bounds = array<i64: 1>, scalar_prefetch = 0 : i64, scratch_operands = 1 : i64, tpu.core_type = #tpu.core_type<tc>, window_params = [{transform_indices = @transform_0, window_bounds = array<i64: 4, 128>}, {transform_indices = @transform_1, window_bounds = array<i64: 1, 128>}, {transform_indices = @transform_2, window_bounds = array<i64: 1, 1>}]} {
    %c0_i32 = arith.constant 0 : i32
    %0 = arith.cmpi eq, %arg0, %c0_i32 : i32
    %1 = arith.extui %0 : i1 to i32
    %c0_i32_0 = arith.constant 0 : i32
    %2 = arith.cmpi ne, %1, %c0_i32_0 : i32
    scf.if %2 {
      %cst_12 = arith.constant 0.000000e+00 : f32
      %37 = vector.broadcast %cst_12 : f32 to vector<4x128xf32>
      %c0_13 = arith.constant 0 : index
      %c0_14 = arith.constant 0 : index
      %38 = vector.load %arg4[%c0_13, %c0_14] : memref<4x128xf32, #tpu.memory_space<vmem>>, vector<4x128xf32>
      tpu.vector_store %arg4[%c0_13, %c0_14], %37 {strides = array<i32>} : memref<4x128xf32, #tpu.memory_space<vmem>>, vector<4x128xf32>,
    } else {
    }
    %c0 = arith.constant 0 : index
    %c0_1 = arith.constant 0 : index
    %3 = vector.load %arg1[%c0, %c0_1] : memref<4x128xf32, #tpu.memory_space<vmem>>, vector<4x128xf32>
    %c0_2 = arith.constant 0 : index
    %c0_3 = arith.constant 0 : index
    %4 = vector.load %arg2[%c0_2, %c0_3] : memref<1x128xi32, #tpu.memory_space<vmem>>, vector<1x128xi32>
    %5 = tpu.iota {dimensions = array<i32: 0>} : vector<4x128xi32>
    %6 = tpu.iota {dimensions = array<i32: 1>} : vector<4x128xi32>
    %c128_i32 = arith.constant 128 : i32
    %7 = arith.muli %arg0, %c128_i32 : i32
    %8 = vector.broadcast %7 : i32 to vector<4x128xi32>
    %9 = arith.addi %6, %8 : vector<4x128xi32>
    %c1_i32 = arith.constant 1 : i32
    %10 = vector.broadcast %c1_i32 : i32 to vector<4x128xi32>
    %11 = arith.cmpi sge, %5, %10 : vector<4x128xi32>
    %c16_i32 = arith.constant 16 : i32
    %12 = vector.broadcast %c16_i32 : i32 to vector<4x128xi32>
    %13 = arith.cmpi slt, %9, %12 : vector<4x128xi32>
    %14 = arith.andi %11, %13 : vector<4x128xi1>
    %15 = vector.broadcast %4 : vector<1x128xi32> to vector<4x128xi32>
    %16 = arith.cmpi eq, %15, %5 : vector<4x128xi32>
    %17 = arith.extui %16 : vector<4x128xi1> to vector<4x128xi32>
    %18 = arith.sitofp %17 : vector<4x128xi32> to vector<4x128xf32>
    %cst = arith.constant 0.000000e+00 : f32
    %19 = vector.broadcast %cst : f32 to vector<4x128xf32>
    %20 = arith.maximumf %3, %19 : vector<4x128xf32>
    %21 = arith.mulf %3, %18 : vector<4x128xf32>
    %22 = arith.subf %20, %21 : vector<4x128xf32>
    %23 = math.absf %3 : vector<4x128xf32>
    %cst_4 = arith.constant 0.000000e+00 : f32
    %24 = vector.broadcast %cst_4 : f32 to vector<4x128xf32>
    %25 = arith.subf %24, %23 : vector<4x128xf32>
    %26 = math.exp %25 : vector<4x128xf32>
    %27 = math.log1p %26 : vector<4x128xf32>
    %28 = arith.addf %22, %27 : vector<4x128xf32>
    %c0_5 = arith.constant 0 : index
    %c0_6 = arith.constant 0 : index
    %29 = vector.load %arg4[%c0_5, %c0_6] : memref<4x128xf32, #tpu.memory_space<vmem>>, vector<4x128xf32>
    %cst_7 = arith.constant 0.000000e+00 : f32
    %30 = vector.broadcast %cst_7 : f32 to vector<4x128xf32>
    %31 = arith.select %14, %28, %30 : vector<4x128xi1>, vector<4x128xf32>
    %32 = arith.addf %29, %31 : vector<4x128xf32>
    %c0_8 = arith.constant 0 : index
    %c0_9 = arith.constant 0 : index
    %33 = vector.load %arg4[%c0_8, %c0_9] : memref<4x128xf32, #tpu.memory_space<vmem>>, vector<4x128xf32>
    tpu.vector_store %arg4[%c0_8, %c0_9], %32 {strides = array<i32>} : memref<4x128xf32, #tpu.memory_space<vmem>>, vector<4x128xf32>,
    %c0_i32_10 = arith.constant 0 : i32
    %34 = arith.cmpi eq, %arg0, %c0_i32_10 : i32
    %35 = arith.extui %34 : i1 to i32
    %c0_i32_11 = arith.constant 0 : i32
    %36 = arith.cmpi ne, %35, %c0_i32_11 : i32
    scf.if %36 {
      %c0_12 = arith.constant 0 : index
      %c0_13 = arith.constant 0 : index
      %37 = vector.load %arg4[%c0_12, %c0_13] : memref<4x128xf32, #tpu.memory_space<vmem>>, vector<4x128xf32>
      %38 = vector.shape_cast %37 : vector<4x128xf32> to vector<1x4x128xf32>
      %cst_14 = arith.constant dense<0.000000e+00> : vector<1xf32>
      %39 = vector.multi_reduction <add>, %38, %cst_14 [1, 2] : vector<1x4x128xf32> to vector<1xf32>
      %40 = vector.shape_cast %39 : vector<1xf32> to vector<1x1x1xf32>
      %41 = vector.extract %40[0, 0, 0] : f32 from vector<1x1x1xf32>
      %cst_15 = arith.constant 3.000000e+00 : f32
      %42 = arith.divf %41, %cst_15 : f32
      %c0_16 = arith.constant 0 : index
      %c0_17 = arith.constant 0 : index
      %43 = memref.load %arg3[%c0_16, %c0_17] : memref<1x1xf32, #tpu.memory_space<smem>>
      memref.store %42, %arg3[%c0_16, %c0_17] : memref<1x1xf32, #tpu.memory_space<smem>>
    } else {
    }
    return
  }
  func.func @transform_0(%arg0: i32) -> (i32, i32) {
    %c0_i32 = arith.constant 0 : i32
    %c0_i32_0 = arith.constant 0 : i32
    return %c0_i32, %arg0 : i32, i32
  }
  func.func @transform_1(%arg0: i32) -> (i32, i32) {
    %c0_i32 = arith.constant 0 : i32
    %c0_i32_0 = arith.constant 0 : i32
    return %c0_i32, %arg0 : i32, i32
  }
  func.func @transform_2(%arg0: i32) -> (i32, i32) {
    %c0_i32 = arith.constant 0 : i32
    %c0_i32_0 = arith.constant 0 : i32
    %c0_i32_1 = arith.constant 0 : i32
    return %c0_i32, %c0_i32_0 : i32, i32
  }
}

</mosaic_0001>

<llo_original>
// kernel: tpu_custom_call.1
$region0: #{tpu_custom_call.1}
  #allocation0 [shape = 'u32[]', space=smem, size = 0x4, offset = 0x4, fixed_abs, tag = 'smem constant byte address 0x4 - core index']
  #allocation1 [shape = 'u32[144,128]{1,0:T(1,128)}', space=vmem, size = 0x12000, scoped, tag = 'internal scratch']
  #allocation2 [shape = 'f32[4,128]{1,0:T(4,128)}', space=vmem, size = 0x800, scoped, tag = 'scratch operand']
  %s0 = inlined_call_operand.hbm [shape: f32[4,128], index: 0, kind: input, shape index: {}]
  %s1 = inlined_call_operand.vmem [shape: s32[1,128], index: 1, kind: input, shape index: {}]
  %s2 = inlined_call_operand.hbm [shape: f32[1,1], index: 2, kind: output, shape index: {}]
  %s3 = sld [smem:[#allocation0]]
  $region30: #{tpu_custom_call.1} parent=0
    _
  %s5 = ssub.s32 1, %s3
  %s6 = scalar_select 0, %s5, %s3
  $region1: #{tpu_custom_call.1} parent=0
    #allocation3 [shape = 'u8[2048]{0}', space=vmem, size = 0x800, scoped, tag = 'input window, operand 0, single buffered']
    #allocation4 [shape = 's32[1]{0}', space=sflag, size = 0x4, scoped, tag = 'scoped memory for tpu_custom_call.1']
    #allocation5 [shape = 's32[1]{0}', space=sflag, size = 0x4, scoped, tag = 'scoped memory for tpu_custom_call.1']
    #allocation6 [shape = 'u8[512]{0}', space=smem, size = 0x200, scoped, tag = 'output window, operand 0, single buffered']
    %7 = vsyncpa [#allocation4], 0
    %8 = vsyncpa [#allocation5], 0
    // Predicated region
    $region2: #{tpu_custom_call.1} parent=1 // pred_check
      _
    $region3: #{tpu_custom_call.1} parent=1 // pred_check_branch
      %10 = sbr.rel (0) target = $region5
    $region4: #{tpu_custom_call.1} parent=1 // pred_region
      %s12 = ssub.s32 64, 64
      %13 = vsyncadd [#allocation4], %s12
      %s15 = sshll.u32 [#allocation3], 4
      %s16 = int_to_ptr.vmem [resolvable:$true] %s15
      %18 = dma.hbm_to_vmem [thread:$0]  %s0, 64, %s16, [#allocation4]
    $region5: #{tpu_custom_call.1} parent=1 // pred_fallthru
      _
    // Predicated region
    $region6: #{tpu_custom_call.1} parent=1 // pred_check
      _
    $region7: #{tpu_custom_call.1} parent=1 // pred_check_branch
      %20 = sbr.rel (0) target = $region9
    $region8: #{tpu_custom_call.1} parent=1 // pred_region
      _
    $region9: #{tpu_custom_call.1} parent=1 // pred_fallthru
      _
    // Predicated region
    $region10: #{tpu_custom_call.1} parent=1 // pred_check
      _
    $region11: #{tpu_custom_call.1} parent=1 // pred_check_branch
      %22 = sbr.rel (0) target = $region13
    $region12: #{tpu_custom_call.1} parent=1 // pred_region
      %23 = dma.done [#allocation4], 64
    $region13: #{tpu_custom_call.1} parent=1 // pred_fallthru
      _
    %p24 = scmp.eq.s32.totalorder 0, 0
    // Predicated region
    $region14: #{tpu_custom_call.1} parent=1 // pred_check
      %p25 = pneg %p24
    $region15: #{tpu_custom_call.1} parent=1 // pred_check_branch
      %27 = sbr.rel (%p25) target = $region17
    $region16: #{tpu_custom_call.1} parent=1 // pred_region
      %28 = vst [vmem:[#allocation2] sm:$0xf] 0.0
    $region17: #{tpu_custom_call.1} parent=1 // pred_fallthru
      _
    %v29 = vld [vmem:[#allocation3] sm:$0xf]
    %v30 = vld [vmem:[%s1] sm:$0x1]
    %v31 = vlaneseq
    %v32 = vshrl.u32 %v31, 7
    %v33 = vlaneseq
    %v34 = vand.u32 %v33, 127
    %s35 = smul.u32 0, 128
    %v36 = vstv %s35
    %v37 = vadd.s32 %v34, %v36
    %vm38 = vcmp.ge.s32.totalorder %v32, 1
    %vm39 = vcmp.lt.s32.totalorder %v37, 16
    %vm40 = vmand %vm38, %vm39
    %v41 = vlaneseq
    %v42 = vshrl.u32 %v41, 7
    %v43 = vsub.s32 0, %v42
    %v44 = vrot.slane %v30, %v43
    %vm45 = vcmp.eq.s32.totalorder %v44, %v32
    %v46 = vsel %vm45, 1, 0
    %v47 = vcvt.s32.f32 %v46
    %v48 = vmax.f32 %v29, 0.0
    %v49 = vmul.f32 %v29, %v47
    %v50 = vsub.f32 %v48, %v49
    %v51 = vand.u32 2147483647, %v29
    %v52 = vsub.f32 0.0, %v51
    %v53 = vmul.f32 %v52, 1.442695
    %v54 = vpow.pop %v53
    %v55 = vadd.f32 %v54, 1.0
    %v56 = vlog2.pop %v55
    %v57 = vmul.f32 %v56, 0.6931472
    %v58 = vmul.f32 -0.5, %v54
    %v59 = vadd.f32 %v58, 1.0
    %v60 = vmul.f32 %v59, %v54
    %v61 = vand.u32 2147483647, %v54
    %vm62 = vcmp.lt.f32.partialorder %v61, 0.0004427343
    %v63 = vsel %vm62, %v60, %v57
    %v64 = vadd.f32 %v50, %v63
    %v65 = vld [vmem:[#allocation2] sm:$0xf]
    %v66 = vsel %vm40, %v64, 0.0
    %v67 = vadd.f32 %v65, %v66
    %68 = vst [vmem:[#allocation2] sm:$0xf] %v67
    // Predicated region
    $region18: #{tpu_custom_call.1} parent=1 // pred_check
      %p69 = pneg %p24
    $region19: #{tpu_custom_call.1} parent=1 // pred_check_branch
      %71 = sbr.rel (%p69) target = $region21
    $region20: #{tpu_custom_call.1} parent=1 // pred_region
      %v72 = vld [vmem:[#allocation2] sm:$0xf]
      %vm73 = vcmask 1043456
      %v74 = vsel %vm73, %v72, 0.0
      %75 = vadd.xlane.f32.xlu0 %v74
      %v76 = vpop.xlane.xlu0 %75
      %v77 = vrot.slane %v76, 4
      %v78 = vadd.f32 %v76, %v77
      %v79 = vrot.slane %v78, 2
      %v80 = vadd.f32 %v78, %v79
      %v81 = vrot.slane %v80, 1
      %v82 = vadd.f32 %v80, %v81
      %s83 = vtos %v82
      %v84 = vrcp.pop 3.0
      %s85 = vtos %v84
      %s86 = smul.f32 %s83, %s85
      %s87 = scalar_lea.smem [#allocation6], 0
      %88 = sst [smem:[%s87]] %s86
    $region21: #{tpu_custom_call.1} parent=1 // pred_fallthru
      _
    // Predicated region
    $region22: #{tpu_custom_call.1} parent=1 // pred_check
      _
    $region23: #{tpu_custom_call.1} parent=1 // pred_check_branch
      %90 = sbr.rel (0) target = $region25
    $region24: #{tpu_custom_call.1} parent=1 // pred_region
      %s92 = ssub.s32 16, 16
      %93 = vsyncadd [#allocation5], %s92
      %96 = dma.smem_to_hbm [#allocation6], 16, %s2, [#allocation5]
    $region25: #{tpu_custom_call.1} parent=1 // pred_fallthru
      _
    // Predicated region
    $region26: #{tpu_custom_call.1} parent=1 // pred_check
      _
    $region27: #{tpu_custom_call.1} parent=1 // pred_check_branch
      %98 = sbr.rel (0) target = $region29
    $region28: #{tpu_custom_call.1} parent=1 // pred_region
      %99 = dma.done [#allocation5], 16
    $region29: #{tpu_custom_call.1} parent=1 // pred_fallthru
      _
    %100 = sfence
    %101 = vsyncpa [#allocation4], 1
    %102 = vsyncpa [#allocation5], 1

</llo_original>
